<compile_context>
chip_gen: v5e
topology: v5e:2x2
jax: 0.10.0
libtpu: 0.0.40
codegen_flags: <defaults>
</compile_context>

<pallas_src>
import math

import jax
import jax.numpy as jnp
from jax.experimental import pallas as pl
from jax.experimental.pallas import tpu as pltpu


def _round_up(x, m):
    return ((x + m - 1) // m) * m


def _lora_linear_kernel(x_ref, wo_t_ref, b_ref, wd_t_ref, wu_t_ref, o_ref,
                        down_ref):
    # x_ref    : (tm, in_dim)   activations (compute dtype, e.g. bf16)
    # wo_t_ref : (in_dim, tn)   org weight, transposed, N-tiled
    # b_ref    : (1, tn)        org bias (f32), N-tiled
    # wd_t_ref : (in_dim, r)    lora_down weight, transposed (constant block)
    # wu_t_ref : (r, tn)        lora_up weight, transposed, pre-scaled by coeff
    # o_ref    : (tm, tn)
    # down_ref : (tm, r) f32 VMEM scratch, persists across the inner j axis.
    j = pl.program_id(1)

    # The down-projection depends only on the row block i; compute it once
    # per row block (j == 0) and reuse it for every output-column tile.
    @pl.when(j == 0)
    def _():
        down_ref[...] = jnp.dot(x_ref[...], wd_t_ref[...],
                                preferred_element_type=jnp.float32)

    base = jnp.dot(x_ref[...], wo_t_ref[...], preferred_element_type=jnp.float32)
    up = jnp.dot(down_ref[...].astype(wu_t_ref.dtype), wu_t_ref[...],
                 preferred_element_type=jnp.float32)

    o_ref[...] = (base + b_ref[...] + up).astype(o_ref.dtype)


def prepare_lora_linear_params(w_org, b_org, w_down, w_up, multiplier, scale, *,
                               compute_dtype=jnp.bfloat16):
    """One-time parameter preprocessing — call once at load time, NOT per forward.

    Transposes weights to row-major MXU layout, folds multiplier*scale into the
    tiny up-projection weight, zero-pads out_dim to a multiple of 128 and the
    LoRA rank to a multiple of 16, and casts to the compute dtype.

    NOTE: coeff is baked into wu_t; if multiplier/scale change at runtime,
    re-run prepare (or pass coeff as a scalar input instead).
    """
    out_dim, in_dim = w_org.shape
    r = w_down.shape[0]
    coeff = float(multiplier) * float(scale)

    n_pad = _round_up(out_dim, 128)
    r_pad = _round_up(max(r, 16), 16)

    wo_t = jnp.zeros((in_dim, n_pad), compute_dtype).at[:, :out_dim].set(
        w_org.T.astype(compute_dtype))
    wd_t = jnp.zeros((in_dim, r_pad), compute_dtype).at[:, :r].set(
        w_down.T.astype(compute_dtype))
    wu_t = jnp.zeros((r_pad, n_pad), compute_dtype).at[:r, :out_dim].set(
        (w_up.T * coeff).astype(compute_dtype))
    b2 = jnp.zeros((1, n_pad), jnp.float32).at[:, :out_dim].set(
        b_org.astype(jnp.float32))

    return dict(wo_t=wo_t, wd_t=wd_t, wu_t=wu_t, b2=b2,
                in_dim=in_dim, out_dim=out_dim, r_pad=r_pad,
                compute_dtype=compute_dtype)


def lora_linear_forward(x, params, *, tm=512, tn=512, out_dtype=None,
                        vmem_budget_bytes=48 * 1024 * 1024):
    """x: (..., in_dim). Returns (..., out_dim). params from prepare_lora_linear_params."""
    in_dim = params["in_dim"]
    out_dim = params["out_dim"]
    r_pad = params["r_pad"]
    compute_dtype = params["compute_dtype"]
    wo_t, wd_t, wu_t, b2 = params["wo_t"], params["wd_t"], params["wu_t"], params["b2"]
    n_pad = wo_t.shape[1]

    out_dtype = x.dtype if out_dtype is None else out_dtype
    lead_shape = x.shape[:-1]
    M = 1
    for d in lead_shape:
        M *= d
    x2 = x.reshape(M, in_dim).astype(compute_dtype)

    cd_sz = jnp.dtype(compute_dtype).itemsize
    out_sz = jnp.dtype(out_dtype).itemsize

    def pick_tn(cap):
        cap = max(128, (min(cap, n_pad) // 128) * 128)
        for cand in range(cap, 0, -128):
            if n_pad % cand == 0:
                return cand
        return 128

    def footprint(tm_, tn_):
        # double-buffered pipelined tiles + down scratch
        return (2 * (tm_ * in_dim * cd_sz            # x tile
                     + in_dim * tn_ * cd_sz          # wo_t tile
                     + tn_ * 4                       # bias tile (f32)
                     + in_dim * r_pad * cd_sz        # wd_t (constant block)
                     + r_pad * tn_ * cd_sz           # wu_t tile
                     + tm_ * tn_ * out_sz)           # out tile
                + tm_ * r_pad * 4)                   # down scratch

    # Row tile: multiple of 16 (bf16 packs 2 rows/sublane); expose >=2 row
    # blocks when possible so both v7x TensorCores get work on the parallel axis.
    m16 = _round_up(M, 16)
    tm_eff = min(tm, m16)
    if m16 // tm_eff < 2 and m16 >= 32:
        tm_eff = _round_up((m16 + 1) // 2, 16)
    tn_eff = pick_tn(tn)

    # Shrink tiles until the double-buffered footprint fits the VMEM budget.
    while footprint(tm_eff, tn_eff) > vmem_budget_bytes and tn_eff > 128:
        tn_eff = pick_tn(tn_eff // 2)
    while footprint(tm_eff, tn_eff) > vmem_budget_bytes and tm_eff > 16:
        tm_eff = max(16, _round_up(tm_eff // 2, 16))

    m_pad = _round_up(M, tm_eff)
    if m_pad != M:
        x2 = jnp.pad(x2, ((0, m_pad - M), (0, 0)))

    m_blocks = m_pad // tm_eff
    n_blocks = n_pad // tn_eff
    grid = (m_blocks, n_blocks)

    flops = 2 * M * (in_dim * out_dim + in_dim * r_pad + r_pad * out_dim)
    bytes_accessed = (
        m_pad * in_dim * cd_sz                                 # x, fetched once
        + in_dim * r_pad * cd_sz                               # wd_t, fetched once
        + m_blocks * (in_dim * n_pad * cd_sz                   # wo_t re-streamed per row block
                      + r_pad * n_pad * cd_sz                  # wu_t re-streamed per row block
                      + n_pad * 4)                             # bias re-streamed
        + m_pad * n_pad * out_sz)                              # output writeback

    # TODO(synk): for very large in_dim (>~8K on v7x) add a K grid axis with an
    # f32 VMEM accumulator (pl.when init/finalize); not needed at typical sizes.
    # TODO(synk): when out_dim >> M, swapping the loop order (i innermost)
    # would stream the large weight exactly once; with the per-row-block down
    # scratch we keep j innermost (re-stream factor m_blocks is small there).
    out2 = pl.pallas_call(
        _lora_linear_kernel,
        out_shape=jax.ShapeDtypeStruct((m_pad, n_pad), out_dtype),
        grid_spec=pltpu.PrefetchScalarGridSpec(
            num_scalar_prefetch=0,
            grid=grid,
            in_specs=[
                pl.BlockSpec((tm_eff, in_dim), lambda i, j: (i, 0)),   # x rows
                pl.BlockSpec((in_dim, tn_eff), lambda i, j: (0, j)),   # org W^T tile
                pl.BlockSpec((1, tn_eff), lambda i, j: (0, j)),        # org bias tile
                pl.BlockSpec((in_dim, r_pad), lambda i, j: (0, 0)),    # down W^T (constant)
                pl.BlockSpec((r_pad, tn_eff), lambda i, j: (0, j)),    # up W^T tile (pre-scaled)
            ],
            out_specs=pl.BlockSpec((tm_eff, tn_eff), lambda i, j: (i, j)),
            scratch_shapes=[pltpu.VMEM((tm_eff, r_pad), jnp.float32)],
        ),
        compiler_params=pltpu.CompilerParams(
            dimension_semantics=("parallel", "arbitrary"),
            vmem_limit_bytes=int(vmem_budget_bytes),
        ),
        cost_estimate=pl.CostEstimate(
            flops=flops, transcendentals=0, bytes_accessed=bytes_accessed),
    )(x2, wo_t, b2, wd_t, wu_t)

    out2 = out2[:M, :out_dim]
    return out2.reshape(*lead_shape, out_dim)


def _kaiming_uniform(key, shape, a=math.sqrt(5)):
    # matches nn.init.kaiming_uniform_(w, a=sqrt(5)) for a 2-D weight (fan_in = shape[1])
    fan_in = shape[1]
    gain = math.sqrt(2.0 / (1.0 + a * a))
    bound = gain * math.sqrt(3.0 / fan_in)
    return jax.random.uniform(key, shape, jnp.float32, -bound, bound)


if __name__ == "__main__":
    # Small shapes consistent with a Linear org_module wrapped by LoRAModule.
    batch, seq, in_dim, out_dim, lora_dim = 2, 8, 256, 256, 4
    multiplier = 1.0
    alpha = lora_dim
    scale = alpha / lora_dim  # = 1.0 (lora_dim_factor == 0 path)

    key = jax.random.PRNGKey(0)
    kx, kwo, kbo, kwd, kwu = jax.random.split(key, 5)

    x = jax.random.normal(kx, (batch, seq, in_dim), jnp.float32)

    # org Linear params (out_dim, in_dim) + bias
    w_org = _kaiming_uniform(kwo, (out_dim, in_dim))
    b_bound = 1.0 / math.sqrt(in_dim)
    b_org = jax.random.uniform(kbo, (out_dim,), jnp.float32, -b_bound, b_bound)

    # lora_down: kaiming_uniform(a=sqrt(5)); lora_up: zeros in the reference
    # __init__ — replaced by small random values here to exercise the LoRA path.
    w_down = _kaiming_uniform(kwd, (lora_dim, in_dim))
    w_up = 0.01 * jax.random.normal(kwu, (out_dim, lora_dim), jnp.float32)

    # One-time parameter prep (transpose/cast/coeff-fold/pad), then forward.
    params = prepare_lora_linear_params(w_org, b_org, w_down, w_up,
                                        multiplier, scale)
    out = lora_linear_forward(x, params)
    out = jax.block_until_ready(out)

    # --- Reference checks -------------------------------------------------
    coeff = multiplier * scale
    x2 = x.reshape(-1, in_dim)

    # (1) Same-precision reference (bf16 operands, f32 accumulation) — tight.
    cd = jnp.bfloat16
    xc = x2.astype(cd)
    base = jnp.dot(xc, w_org.T.astype(cd), preferred_element_type=jnp.float32) + b_org
    down = jnp.dot(xc, w_down.T.astype(cd), preferred_element_type=jnp.float32)
    up = jnp.dot(down.astype(cd), (w_up.T * coeff).astype(cd),
                 preferred_element_type=jnp.float32)
    ref_bf16 = (base + up).reshape(batch, seq, out_dim)
    assert jnp.allclose(out, ref_bf16, atol=1e-2, rtol=1e-2), \
        "mismatch vs same-precision reference"

    # (2) Pure f32 reference — loose (bf16 compute dtype is the only delta).
    ref_f32 = ((x2 @ w_org.T + b_org) + ((x2 @ w_down.T) @ w_up.T) * coeff)
    ref_f32 = ref_f32.reshape(batch, seq, out_dim)
    assert jnp.allclose(out, ref_f32, atol=1e-1, rtol=1e-1), \
        "mismatch vs f32 reference"

    # TODO(synk): Conv2d org_module branch (lora_down = Conv2d kxk, lora_up = 1x1)
    # not implemented; this script covers the Linear branch of LoRAModule.
    # TODO(synk): optional inference fast path: pre-merge
    # W_eff = W_org + coeff * (W_up @ W_down) and run a single dense matmul.

    print("KERNEL_OK")
</pallas_src>

<mosaic_0001>
module attributes {stable_mosaic.version = 11 : i64} {
  func.func @_lora_linear_kernel(%arg0: i32, %arg1: i32, %arg2: memref<16x256xbf16, #tpu.memory_space<vmem>>, %arg3: memref<256x256xbf16, #tpu.memory_space<vmem>>, %arg4: memref<1x256xf32, #tpu.memory_space<vmem>>, %arg5: memref<256x16xbf16, #tpu.memory_space<vmem>>, %arg6: memref<16x256xbf16, #tpu.memory_space<vmem>>, %arg7: memref<16x256xf32, #tpu.memory_space<vmem>>, %arg8: memref<16x16xf32, #tpu.memory_space<vmem>>) attributes {dimension_semantics = [#tpu.dimension_semantics<parallel>, #tpu.dimension_semantics<arbitrary>], iteration_bounds = array<i64: 1, 1>, scalar_prefetch = 0 : i64, scratch_operands = 1 : i64, tpu.core_type = #tpu.core_type<tc>, window_params = [{transform_indices = @transform_0, window_bounds = array<i64: 16, 256>}, {transform_indices = @transform_1, window_bounds = array<i64: 256, 256>}, {transform_indices = @transform_2, window_bounds = array<i64: 1, 256>}, {pipeline_mode = #tpu.pipeline_mode<synchronous>, transform_indices = @transform_3, window_bounds = array<i64: 256, 16>}, {transform_indices = @transform_4, window_bounds = array<i64: 16, 256>}, {transform_indices = @transform_5, window_bounds = array<i64: 16, 256>}]} {
    %c0_i32 = arith.constant 0 : i32
    %0 = arith.cmpi eq, %arg1, %c0_i32 : i32
    %1 = arith.extui %0 : i1 to i32
    %c0_i32_0 = arith.constant 0 : i32
    %2 = arith.cmpi ne, %1, %c0_i32_0 : i32
    scf.if %2 {
      %c0_13 = arith.constant 0 : index
      %c0_14 = arith.constant 0 : index
      %15 = vector.load %arg2[%c0_13, %c0_14] : memref<16x256xbf16, #tpu.memory_space<vmem>>, vector<16x256xbf16>
      %c0_15 = arith.constant 0 : index
      %c0_16 = arith.constant 0 : index
      %16 = vector.load %arg5[%c0_15, %c0_16] : memref<256x16xbf16, #tpu.memory_space<vmem>>, vector<256x16xbf16>
      %cst_17 = arith.constant dense<0.000000e+00> : vector<16x16xf32>
      %17 = tpu.matmul %15, %16, %cst_17 {dimension_numbers = #tpu.dot_dimension_numbers<[1], [0], [0], [1], [0, 0, 1, 1], [], []>} : vector<16x256xbf16>, vector<256x16xbf16>, vector<16x16xf32> -> vector<16x16xf32>
      %c0_18 = arith.constant 0 : index
      %c0_19 = arith.constant 0 : index
      %18 = vector.load %arg8[%c0_18, %c0_19] : memref<16x16xf32, #tpu.memory_space<vmem>>, vector<16x16xf32>
      tpu.vector_store %arg8[%c0_18, %c0_19], %17 {strides = array<i32>} : memref<16x16xf32, #tpu.memory_space<vmem>>, vector<16x16xf32>,
    } else {
    }
    %c0 = arith.constant 0 : index
    %c0_1 = arith.constant 0 : index
    %3 = vector.load %arg2[%c0, %c0_1] : memref<16x256xbf16, #tpu.memory_space<vmem>>, vector<16x256xbf16>
    %c0_2 = arith.constant 0 : index
    %c0_3 = arith.constant 0 : index
    %4 = vector.load %arg3[%c0_2, %c0_3] : memref<256x256xbf16, #tpu.memory_space<vmem>>, vector<256x256xbf16>
    %cst = arith.constant dense<0.000000e+00> : vector<16x256xf32>
    %5 = tpu.matmul %3, %4, %cst {dimension_numbers = #tpu.dot_dimension_numbers<[1], [0], [0], [1], [0, 0, 1, 1], [], []>} : vector<16x256xbf16>, vector<256x256xbf16>, vector<16x256xf32> -> vector<16x256xf32>
    %c0_4 = arith.constant 0 : index
    %c0_5 = arith.constant 0 : index
    %6 = vector.load %arg8[%c0_4, %c0_5] : memref<16x16xf32, #tpu.memory_space<vmem>>, vector<16x16xf32>
    %7 = arith.truncf %6 : vector<16x16xf32> to vector<16x16xbf16>
    %c0_6 = arith.constant 0 : index
    %c0_7 = arith.constant 0 : index
    %8 = vector.load %arg6[%c0_6, %c0_7] : memref<16x256xbf16, #tpu.memory_space<vmem>>, vector<16x256xbf16>
    %cst_8 = arith.constant dense<0.000000e+00> : vector<16x256xf32>
    %9 = tpu.matmul %7, %8, %cst_8 {dimension_numbers = #tpu.dot_dimension_numbers<[1], [0], [0], [1], [0, 0, 1, 1], [], []>} : vector<16x16xbf16>, vector<16x256xbf16>, vector<16x256xf32> -> vector<16x256xf32>
    %c0_9 = arith.constant 0 : index
    %c0_10 = arith.constant 0 : index
    %10 = vector.load %arg4[%c0_9, %c0_10] : memref<1x256xf32, #tpu.memory_space<vmem>>, vector<1x256xf32>
    %11 = vector.broadcast %10 : vector<1x256xf32> to vector<16x256xf32>
    %12 = arith.addf %5, %11 : vector<16x256xf32>
    %13 = arith.addf %12, %9 : vector<16x256xf32>
    %c0_11 = arith.constant 0 : index
    %c0_12 = arith.constant 0 : index
    %14 = vector.load %arg7[%c0_11, %c0_12] : memref<16x256xf32, #tpu.memory_space<vmem>>, vector<16x256xf32>
    tpu.vector_store %arg7[%c0_11, %c0_12], %13 {strides = array<i32>} : memref<16x256xf32, #tpu.memory_space<vmem>>, vector<16x256xf32>,
    return
  }
  func.func @transform_0(%arg0: i32, %arg1: i32) -> (i32, i32) {
    %c0_i32 = arith.constant 0 : i32
    %c0_i32_0 = arith.constant 0 : i32
    return %arg0, %c0_i32 : i32, i32
  }
  func.func @transform_1(%arg0: i32, %arg1: i32) -> (i32, i32) {
    %c0_i32 = arith.constant 0 : i32
    %c0_i32_0 = arith.constant 0 : i32
    return %c0_i32, %arg1 : i32, i32
  }
  func.func @transform_2(%arg0: i32, %arg1: i32) -> (i32, i32) {
    %c0_i32 = arith.constant 0 : i32
    %c0_i32_0 = arith.constant 0 : i32
    return %c0_i32, %arg1 : i32, i32
  }
  func.func @transform_3(%arg0: i32, %arg1: i32) -> (i32, i32) {
    %c0_i32 = arith.constant 0 : i32
    %c0_i32_0 = arith.constant 0 : i32
    %c0_i32_1 = arith.constant 0 : i32
    return %c0_i32, %c0_i32_0 : i32, i32
  }
  func.func @transform_4(%arg0: i32, %arg1: i32) -> (i32, i32) {
    %c0_i32 = arith.constant 0 : i32
    %c0_i32_0 = arith.constant 0 : i32
    return %c0_i32, %arg1 : i32, i32
  }
  func.func @transform_5(%arg0: i32, %arg1: i32) -> (i32, i32) {
    %c0_i32 = arith.constant 0 : i32
    return %arg0, %arg1 : i32, i32
  }
}

</mosaic_0001>

<llo_original>
// kernel: tpu_custom_call.1
$region0: #{tpu_custom_call.1}
  #allocation0 [shape = 'u32[]', space=smem, size = 0x4, offset = 0x4, fixed_abs, tag = 'smem constant byte address 0x4 - core index']
  #allocation1 [shape = 'u32[72,128]{1,0:T(1,128)}', space=vmem, size = 0x9000, scoped, tag = 'internal scratch']
  #allocation2 [shape = 'f32[16,16]{1,0:T(8,128)}', space=vmem, size = 0x2000, scoped, tag = 'scratch operand']
  %s0 = inlined_call_operand.vmem [shape: bf16[16,256], index: 0, kind: input, shape index: {}]
  %s1 = inlined_call_operand.hbm [shape: bf16[256,256], index: 1, kind: input, shape index: {}]
  %s2 = inlined_call_operand.vmem [shape: f32[1,256], index: 2, kind: input, shape index: {}]
  %s3 = inlined_call_operand.vmem [shape: bf16[256,16], index: 3, kind: input, shape index: {}]
  %s4 = inlined_call_operand.vmem [shape: bf16[16,256], index: 4, kind: input, shape index: {}]
  %s5 = inlined_call_operand.hbm [shape: f32[16,256], index: 5, kind: output, shape index: {}]
  %s6 = sld [smem:[#allocation0]]
  $region38: #{tpu_custom_call.1} parent=0
    _
  %s8 = ssub.s32 1, %s6
  %s9 = scalar_select 0, %s8, %s6
  $region1: #{tpu_custom_call.1} parent=0
    #allocation3 [shape = 'u8[131072]{0}', space=vmem, size = 0x20000, scoped, tag = 'input window, operand 1, single buffered']
    #allocation4 [shape = 's32[1]{0}', space=sflag, size = 0x4, scoped, tag = 'scoped memory for tpu_custom_call.1']
    #allocation5 [shape = 's32[1]{0}', space=sflag, size = 0x4, scoped, tag = 'scoped memory for tpu_custom_call.1']
    #allocation6 [shape = 'u8[16384]{0}', space=vmem, size = 0x4000, scoped, tag = 'output window, operand 0, single buffered']
    %10 = vsyncpa [#allocation4], 0
    %11 = vsyncpa [#allocation5], 0
    // Predicated region
    $region2: #{tpu_custom_call.1} parent=1 // pred_check
      _
    $region3: #{tpu_custom_call.1} parent=1 // pred_check_branch
      %13 = sbr.rel (0) target = $region5
    $region4: #{tpu_custom_call.1} parent=1 // pred_region
      _
    $region5: #{tpu_custom_call.1} parent=1 // pred_fallthru
      _
    // Predicated region
    $region6: #{tpu_custom_call.1} parent=1 // pred_check
      _
    $region7: #{tpu_custom_call.1} parent=1 // pred_check_branch
      %15 = sbr.rel (0) target = $region9
    $region8: #{tpu_custom_call.1} parent=1 // pred_region
      %17 = vsyncadd [#allocation4], 0
      %s18 = sshll.u32 %s1, 4
      %s19 = int_to_ptr.hbm [resolvable:$true] %s18
      %s20 = sshll.u32 [#allocation3], 4
      %s21 = int_to_ptr.vmem [resolvable:$true] %s20
      %26 = dma.hbm_to_vmem [thread:$0]  %s19, 4096, %s21, [#allocation4], 128, 128, 8
    $region9: #{tpu_custom_call.1} parent=1 // pred_fallthru
      _
    // Predicated region
    $region10: #{tpu_custom_call.1} parent=1 // pred_check
      _
    $region11: #{tpu_custom_call.1} parent=1 // pred_check_branch
      %28 = sbr.rel (0) target = $region13
    $region12: #{tpu_custom_call.1} parent=1 // pred_region
      _
    $region13: #{tpu_custom_call.1} parent=1 // pred_fallthru
      _
    // Predicated region
    $region14: #{tpu_custom_call.1} parent=1 // pred_check
      _
    $region15: #{tpu_custom_call.1} parent=1 // pred_check_branch
      %30 = sbr.rel (0) target = $region17
    $region16: #{tpu_custom_call.1} parent=1 // pred_region
      _
    $region17: #{tpu_custom_call.1} parent=1 // pred_fallthru
      _
    // Predicated region
    $region18: #{tpu_custom_call.1} parent=1 // pred_check
      _
    $region19: #{tpu_custom_call.1} parent=1 // pred_check_branch
      %32 = sbr.rel (0) target = $region21
    $region20: #{tpu_custom_call.1} parent=1 // pred_region
      _
    $region21: #{tpu_custom_call.1} parent=1 // pred_fallthru
      _
    // Predicated region
    $region22: #{tpu_custom_call.1} parent=1 // pred_check
      _
    $region23: #{tpu_custom_call.1} parent=1 // pred_check_branch
      %34 = sbr.rel (0) target = $region25
    $region24: #{tpu_custom_call.1} parent=1 // pred_region
      %36 = dma.done [#allocation4], 4096
    $region25: #{tpu_custom_call.1} parent=1 // pred_fallthru
      _
    %p38 = scmp.eq.s32.totalorder 0, 0
    // Predicated region
    $region26: #{tpu_custom_call.1} parent=1 // pred_check
      %p39 = pneg %p38
    $region27: #{tpu_custom_call.1} parent=1 // pred_check_branch
      %41 = sbr.rel (%p39) target = $region29
    $region28: #{tpu_custom_call.1} parent=1 // pred_region
      %v42 = vld [vmem:[%s0] sm:$0xff]
      %v43 = vld [vmem:[%s0 + $0x8] sm:$0xff]
      %v44 = vld [vmem:[%s3] sm:$0xf]
      %v45 = vld [vmem:[%s3 + $0x4] sm:$0xf]
      %v46 = vld [vmem:[%s3 + $0x8] sm:$0xf]
      %v47 = vld [vmem:[%s3 + $0xc] sm:$0xf]
      %v48 = vld [vmem:[%s3 + $0x10] sm:$0xf]
      %v49 = vld [vmem:[%s3 + $0x14] sm:$0xf]
      %v50 = vld [vmem:[%s3 + $0x18] sm:$0xf]
      %v51 = vld [vmem:[%s3 + $0x1c] sm:$0xf]
      %v52 = vld [vmem:[%s3 + $0x20] sm:$0xf]
      %v53 = vld [vmem:[%s3 + $0x24] sm:$0xf]
      %v54 = vld [vmem:[%s3 + $0x28] sm:$0xf]
      %v55 = vld [vmem:[%s3 + $0x2c] sm:$0xf]
      %v56 = vld [vmem:[%s3 + $0x30] sm:$0xf]
      %v57 = vld [vmem:[%s3 + $0x34] sm:$0xf]
      %v58 = vld [vmem:[%s3 + $0x38] sm:$0xf]
      %v59 = vld [vmem:[%s3 + $0x3c] sm:$0xf]
      %v60 = vld [vmem:[%s3 + $0x40] sm:$0xf]
      %v61 = vld [vmem:[%s3 + $0x44] sm:$0xf]
      %v62 = vld [vmem:[%s3 + $0x48] sm:$0xf]
      %v63 = vld [vmem:[%s3 + $0x4c] sm:$0xf]
      %v64 = vld [vmem:[%s3 + $0x50] sm:$0xf]
      %v65 = vld [vmem:[%s3 + $0x54] sm:$0xf]
      %v66 = vld [vmem:[%s3 + $0x58] sm:$0xf]
      %v67 = vld [vmem:[%s3 + $0x5c] sm:$0xf]
      %v68 = vld [vmem:[%s3 + $0x60] sm:$0xf]
      %v69 = vld [vmem:[%s3 + $0x64] sm:$0xf]
      %v70 = vld [vmem:[%s3 + $0x68] sm:$0xf]
      %v71 = vld [vmem:[%s3 + $0x6c] sm:$0xf]
      %v72 = vld [vmem:[%s3 + $0x70] sm:$0xf]
      %v73 = vld [vmem:[%s3 + $0x74] sm:$0xf]
      %v74 = vld [vmem:[%s3 + $0x78] sm:$0xf]
      %v75 = vld [vmem:[%s3 + $0x7c] sm:$0xf]
      %v78 = vunpack.c.l.b16 %v42
      %v79 = vunpack.c.h.b16 %v42
      %v80 = vunpack.c.l.b16 %v43
      %v81 = vunpack.c.h.b16 %v43
      %v82 = vpack.c.b16 %v80, %v78
      %v83 = vpack.c.b16 %v81, %v79
      %v118 = vunpack.c.l.b16 %v44
      %v119 = vunpack.c.l.b16 %v45
      %v120 = vunpack.c.l.b16 %v46
      %v121 = vunpack.c.l.b16 %v47
      %v122 = vunpack.c.l.b16 %v48
      %v123 = vunpack.c.l.b16 %v49
      %v124 = vunpack.c.l.b16 %v50
      %v125 = vunpack.c.l.b16 %v51
      %v126 = vunpack.c.l.b16 %v52
      %v127 = vunpack.c.l.b16 %v53
      %v128 = vunpack.c.l.b16 %v54
      %v129 = vunpack.c.l.b16 %v55
      %v130 = vunpack.c.l.b16 %v56
      %v131 = vunpack.c.l.b16 %v57
      %v132 = vunpack.c.l.b16 %v58
      %v133 = vunpack.c.l.b16 %v59
      %v134 = vunpack.c.l.b16 %v60
      %v135 = vunpack.c.l.b16 %v61
      %v136 = vunpack.c.l.b16 %v62
      %v137 = vunpack.c.l.b16 %v63
      %v138 = vunpack.c.l.b16 %v64
      %v139 = vunpack.c.l.b16 %v65
      %v140 = vunpack.c.l.b16 %v66
      %v141 = vunpack.c.l.b16 %v67
      %v142 = vunpack.c.l.b16 %v68
      %v143 = vunpack.c.l.b16 %v69
      %v144 = vunpack.c.l.b16 %v70
      %v145 = vunpack.c.l.b16 %v71
      %v146 = vunpack.c.l.b16 %v72
      %v147 = vunpack.c.l.b16 %v73
      %v148 = vunpack.c.l.b16 %v74
      %v149 = vunpack.c.l.b16 %v75
      %v150 = vpack.c.b16 %v119, %v118
      %v151 = vpack.c.b16 %v121, %v120
      %v152 = vpack.c.b16 %v123, %v122
      %v153 = vpack.c.b16 %v125, %v124
      %v154 = vpack.c.b16 %v127, %v126
      %v155 = vpack.c.b16 %v129, %v128
      %v156 = vpack.c.b16 %v131, %v130
      %v157 = vpack.c.b16 %v133, %v132
      %v158 = vpack.c.b16 %v135, %v134
      %v159 = vpack.c.b16 %v137, %v136
      %v160 = vpack.c.b16 %v139, %v138
      %v161 = vpack.c.b16 %v141, %v140
      %v162 = vpack.c.b16 %v143, %v142
      %v163 = vpack.c.b16 %v145, %v144
      %v164 = vpack.c.b16 %v147, %v146
      %v165 = vpack.c.b16 %v149, %v148
      %182 = vmatpush.bf16.msra.mxu0 %v157
      %183 = vmatpush.bf16.msra.mxu0 %v156
      %184 = vmatpush.bf16.msra.mxu0 %v155
      %185 = vmatpush.bf16.msra.mxu0 %v154
      %186 = vmatpush.bf16.msra.mxu0 %v153
      %187 = vmatpush.bf16.msra.mxu0 %v152
      %188 = vmatpush.bf16.msra.mxu0 %v151
      %189 = vmatpush.bf16.msra.mxu0 %v150
      %190 = vmatmul.bf16.gmra.mxu0 %v82
      %v191 = vpop.f32.mrf.mxu0
      %v192 = vadd.f32 0.0, %v191
      %v193 = vpop.f32.mrf.mxu0
      %v194 = vadd.f32 0.0, %v193
      %195 = vdwg.mxu0
      %196 = vmatpush.bf16.msra.mxu0 %v165
      %197 = vmatpush.bf16.msra.mxu0 %v164
      %198 = vmatpush.bf16.msra.mxu0 %v163
      %199 = vmatpush.bf16.msra.mxu0 %v162
      %200 = vmatpush.bf16.msra.mxu0 %v161
      %201 = vmatpush.bf16.msra.mxu0 %v160
      %202 = vmatpush.bf16.msra.mxu0 %v159
      %203 = vmatpush.bf16.msra.mxu0 %v158
      %204 = vmatmul.bf16.gmra.mxu0 %v83
      %v205 = vpop.f32.mrf.mxu0
      %v206 = vadd.f32 %v192, %v205
      %v207 = vpop.f32.mrf.mxu0
      %v208 = vadd.f32 %v194, %v207
      %209 = vdwg.mxu0
      %vm210 = vcmask 130048
      %211 = vst.msk [vmem:[#allocation2] sm:$0xff] %vm210, %v206
      %212 = vst.msk [vmem:[#allocation2 + $0x8] sm:$0xff] %vm210, %v208
    $region29: #{tpu_custom_call.1} parent=1 // pred_fallthru
      _
    %v213 = vld [vmem:[%s0] sm:$0xff]
    %v214 = vld [vmem:[%s0 + $0x8] sm:$0xff]
    %v215 = vld [vmem:[#allocation3] sm:$0xff]
    %v216 = vld [vmem:[#allocation3 + $0x8] sm:$0xff]
    %v217 = vld [vmem:[#allocation3 + $0x10] sm:$0xff]
    %v218 = vld [vmem:[#allocation3 + $0x18] sm:$0xff]
    %v219 = vld [vmem:[#allocation3 + $0x20] sm:$0xff]
    %v220 = vld [vmem:[#allocation3 + $0x28] sm:$0xff]
    %v221 = vld [vmem:[#allocation3 + $0x30] sm:$0xff]
    %v222 = vld [vmem:[#allocation3 + $0x38] sm:$0xff]
    %v223 = vld [vmem:[#allocation3 + $0x40] sm:$0xff]
    %v224 = vld [vmem:[#allocation3 + $0x48] sm:$0xff]
    %v225 = vld [vmem:[#allocation3 + $0x50] sm:$0xff]
    %v226 = vld [vmem:[#allocation3 + $0x58] sm:$0xff]
    %v227 = vld [vmem:[#allocation3 + $0x60] sm:$0xff]
    %v228 = vld [vmem:[#allocation3 + $0x68] sm:$0xff]
    %v229 = vld [vmem:[#allocation3 + $0x70] sm:$0xff]
    %v230 = vld [vmem:[#allocation3 + $0x78] sm:$0xff]
    %v231 = vld [vmem:[#allocation3 + $0x80] sm:$0xff]
    %v232 = vld [vmem:[#allocation3 + $0x88] sm:$0xff]
    %v233 = vld [vmem:[#allocation3 + $0x90] sm:$0xff]
    %v234 = vld [vmem:[#allocation3 + $0x98] sm:$0xff]
    %v235 = vld [vmem:[#allocation3 + $0xa0] sm:$0xff]
    %v236 = vld [vmem:[#allocation3 + $0xa8] sm:$0xff]
    %v237 = vld [vmem:[#allocation3 + $0xb0] sm:$0xff]
    %v238 = vld [vmem:[#allocation3 + $0xb8] sm:$0xff]
    %v239 = vld [vmem:[#allocation3 + $0xc0] sm:$0xff]
    %v240 = vld [vmem:[#allocation3 + $0xc8] sm:$0xff]
    %v241 = vld [vmem:[#allocation3 + $0xd0] sm:$0xff]
    %v242 = vld [vmem:[#allocation3 + $0xd8] sm:$0xff]
    %v243 = vld [vmem:[#allocation3 + $0xe0] sm:$0xff]
    %v244 = vld [vmem:[#allocation3 + $0xe8] sm:$0xff]
    %v245 = vld [vmem:[#allocation3 + $0xf0] sm:$0xff]
    %v246 = vld [vmem:[#allocation3 + $0xf8] sm:$0xff]
    %v247 = vld [vmem:[#allocation2] sm:$0xff]
    %v248 = vld [vmem:[#allocation2 + $0x8] sm:$0xff]
    %v249 = vpack.c.bf16 %v248, %v247
    %v250 = vld [vmem:[%s4] sm:$0xff]
    %v251 = vld [vmem:[%s4 + $0x8] sm:$0xff]
    %v254 = vunpack.c.l.b16 %v250
    %v255 = vunpack.c.h.b16 %v250
    %v256 = vunpack.c.l.b16 %v251
    %v257 = vunpack.c.h.b16 %v251
    %v258 = vpack.c.b16 %v256, %v254
    %v259 = vpack.c.b16 %v257, %v255
    %vm262 = vcmask 130048
    %v264 = vsel %vm262, %v249, 0
    %266 = vmatpush.bf16.msra.mxu0 0
    %267 = vmatpush.bf16.msra.mxu0 0
    %268 = vmatpush.bf16.msra.mxu0 0
    %269 = vmatpush.bf16.msra.mxu0 0
    %270 = vmatpush.bf16.msra.mxu0 0
    %271 = vmatpush.bf16.msra.mxu0 0
    %272 = vmatpush.bf16.msra.mxu0 0
    %273 = vmatpush.bf16.msra.mxu0 %v258
    %274 = vmatmul.bf16.gmra.mxu0 %v264
    %v275 = vpop.f32.mrf.mxu0
    %v276 = vadd.f32 0.0, %v275
    %v277 = vpop.f32.mrf.mxu0
    %v278 = vadd.f32 0.0, %v277
    %279 = vdwg.mxu0
    %280 = vmatpush.bf16.msra.mxu0 0
    %281 = vmatpush.bf16.msra.mxu0 0
    %282 = vmatpush.bf16.msra.mxu0 0
    %283 = vmatpush.bf16.msra.mxu0 0
    %284 = vmatpush.bf16.msra.mxu0 0
    %285 = vmatpush.bf16.msra.mxu0 0
    %286 = vmatpush.bf16.msra.mxu0 0
    %287 = vmatpush.bf16.msra.mxu0 %v259
    %288 = vmatmul.bf16.gmra.mxu0 %v264
    %v289 = vpop.f32.mrf.mxu0
    %v290 = vadd.f32 0.0, %v289
    %v291 = vpop.f32.mrf.mxu0
    %v292 = vadd.f32 0.0, %v291
    %293 = vdwg.mxu0
    %v294 = vld [vmem:[%s2] sm:$0x3]
    %v296 = vperm.slane %v294, 0
    %v297 = vperm.slane %v294, 1
    %v302 = vunpack.c.l.b16 %v213
    %v303 = vunpack.c.h.b16 %v213
    %v304 = vunpack.c.l.b16 %v214
    %v305 = vunpack.c.h.b16 %v214
    %v306 = vpack.c.b16 %v304, %v302
    %v307 = vpack.c.b16 %v305, %v303
    %v342 = vunpack.c.l.b16 %v215
    %v343 = vunpack.c.h.b16 %v215
    %v344 = vunpack.c.l.b16 %v216
    %v345 = vunpack.c.h.b16 %v216
    %v346 = vunpack.c.l.b16 %v217
    %v347 = vunpack.c.h.b16 %v217
    %v348 = vunpack.c.l.b16 %v218
    %v349 = vunpack.c.h.b16 %v218
    %v350 = vunpack.c.l.b16 %v219
    %v351 = vunpack.c.h.b16 %v219
    %v352 = vunpack.c.l.b16 %v220
    %v353 = vunpack.c.h.b16 %v220
    %v354 = vunpack.c.l.b16 %v221
    %v355 = vunpack.c.h.b16 %v221
    %v356 = vunpack.c.l.b16 %v222
    %v357 = vunpack.c.h.b16 %v222
    %v358 = vunpack.c.l.b16 %v223
    %v359 = vunpack.c.h.b16 %v223
    %v360 = vunpack.c.l.b16 %v224
    %v361 = vunpack.c.h.b16 %v224
    %v362 = vunpack.c.l.b16 %v225
    %v363 = vunpack.c.h.b16 %v225
    %v364 = vunpack.c.l.b16 %v226
    %v365 = vunpack.c.h.b16 %v226
    %v366 = vunpack.c.l.b16 %v227
    %v367 = vunpack.c.h.b16 %v227
    %v368 = vunpack.c.l.b16 %v228
    %v369 = vunpack.c.h.b16 %v228
    %v370 = vunpack.c.l.b16 %v229
    %v371 = vunpack.c.h.b16 %v229
    %v372 = vunpack.c.l.b16 %v230
    %v373 = vunpack.c.h.b16 %v230
    %v374 = vunpack.c.l.b16 %v231
    %v375 = vunpack.c.h.b16 %v231
    %v376 = vunpack.c.l.b16 %v232
    %v377 = vunpack.c.h.b16 %v232
    %v378 = vunpack.c.l.b16 %v233
    %v379 = vunpack.c.h.b16 %v233
    %v380 = vunpack.c.l.b16 %v234
    %v381 = vunpack.c.h.b16 %v234
    %v382 = vunpack.c.l.b16 %v235
    %v383 = vunpack.c.h.b16 %v235
    %v384 = vunpack.c.l.b16 %v236
    %v385 = vunpack.c.h.b16 %v236
    %v386 = vunpack.c.l.b16 %v237
    %v387 = vunpack.c.h.b16 %v237
    %v388 = vunpack.c.l.b16 %v238
    %v389 = vunpack.c.h.b16 %v238
    %v390 = vunpack.c.l.b16 %v239
    %v391 = vunpack.c.h.b16 %v239
    %v392 = vunpack.c.l.b16 %v240
    %v393 = vunpack.c.h.b16 %v240
    %v394 = vunpack.c.l.b16 %v241
    %v395 = vunpack.c.h.b16 %v241
    %v396 = vunpack.c.l.b16 %v242
    %v397 = vunpack.c.h.b16 %v242
    %v398 = vunpack.c.l.b16 %v243
    %v399 = vunpack.c.h.b16 %v243
    %v400 = vunpack.c.l.b16 %v244
    %v401 = vunpack.c.h.b16 %v244
    %v402 = vunpack.c.l.b16 %v245
    %v403 = vunpack.c.h.b16 %v245
    %v404 = vunpack.c.l.b16 %v246
    %v405 = vunpack.c.h.b16 %v246
    %v406 = vpack.c.b16 %v344, %v342
    %v407 = vpack.c.b16 %v345, %v343
    %v408 = vpack.c.b16 %v348, %v346
    %v409 = vpack.c.b16 %v349, %v347
    %v410 = vpack.c.b16 %v352, %v350
    %v411 = vpack.c.b16 %v353, %v351
    %v412 = vpack.c.b16 %v356, %v354
    %v413 = vpack.c.b16 %v357, %v355
    %v414 = vpack.c.b16 %v360, %v358
    %v415 = vpack.c.b16 %v361, %v359
    %v416 = vpack.c.b16 %v364, %v362
    %v417 = vpack.c.b16 %v365, %v363
    %v418 = vpack.c.b16 %v368, %v366
    %v419 = vpack.c.b16 %v369, %v367
    %v420 = vpack.c.b16 %v372, %v370
    %v421 = vpack.c.b16 %v373, %v371
    %v422 = vpack.c.b16 %v376, %v374
    %v423 = vpack.c.b16 %v377, %v375
    %v424 = vpack.c.b16 %v380, %v378
    %v425 = vpack.c.b16 %v381, %v379
    %v426 = vpack.c.b16 %v384, %v382
    %v427 = vpack.c.b16 %v385, %v383
    %v428 = vpack.c.b16 %v388, %v386
    %v429 = vpack.c.b16 %v389, %v387
    %v430 = vpack.c.b16 %v392, %v390
    %v431 = vpack.c.b16 %v393, %v391
    %v432 = vpack.c.b16 %v396, %v394
    %v433 = vpack.c.b16 %v397, %v395
    %v434 = vpack.c.b16 %v400, %v398
    %v435 = vpack.c.b16 %v401, %v399
    %v436 = vpack.c.b16 %v404, %v402
    %v437 = vpack.c.b16 %v405, %v403
    %470 = vmatpush.bf16.msra.mxu0 %v420
    %471 = vmatpush.bf16.msra.mxu0 %v418
    %472 = vmatpush.bf16.msra.mxu0 %v416
    %473 = vmatpush.bf16.msra.mxu0 %v414
    %474 = vmatpush.bf16.msra.mxu0 %v412
    %475 = vmatpush.bf16.msra.mxu0 %v410
    %476 = vmatpush.bf16.msra.mxu0 %v408
    %477 = vmatpush.bf16.msra.mxu0 %v406
    %478 = vmatmul.bf16.gmra.mxu0 %v306
    %v479 = vpop.f32.mrf.mxu0
    %v480 = vadd.f32 %v296, %v479
    %v481 = vpop.f32.mrf.mxu0
    %v482 = vadd.f32 %v296, %v481
    %483 = vdwg.mxu0
    %484 = vmatpush.bf16.msra.mxu0 %v436
    %485 = vmatpush.bf16.msra.mxu0 %v434
    %486 = vmatpush.bf16.msra.mxu0 %v432
    %487 = vmatpush.bf16.msra.mxu0 %v430
    %488 = vmatpush.bf16.msra.mxu0 %v428
    %489 = vmatpush.bf16.msra.mxu0 %v426
    %490 = vmatpush.bf16.msra.mxu0 %v424
    %491 = vmatpush.bf16.msra.mxu0 %v422
    %492 = vmatmul.bf16.gmra.mxu0 %v307
    %v493 = vpop.f32.mrf.mxu0
    %v494 = vadd.f32 %v480, %v493
    %v495 = vpop.f32.mrf.mxu0
    %v496 = vadd.f32 %v482, %v495
    %497 = vdwg.mxu0
    %498 = vmatpush.bf16.msra.mxu0 %v421
    %499 = vmatpush.bf16.msra.mxu0 %v419
    %500 = vmatpush.bf16.msra.mxu0 %v417
    %501 = vmatpush.bf16.msra.mxu0 %v415
    %502 = vmatpush.bf16.msra.mxu0 %v413
    %503 = vmatpush.bf16.msra.mxu0 %v411
    %504 = vmatpush.bf16.msra.mxu0 %v409
    %505 = vmatpush.bf16.msra.mxu0 %v407
    %506 = vmatmul.bf16.gmra.mxu0 %v306
    %v507 = vpop.f32.mrf.mxu0
    %v508 = vadd.f32 %v297, %v507
    %v509 = vpop.f32.mrf.mxu0
    %v510 = vadd.f32 %v297, %v509
    %511 = vdwg.mxu0
    %512 = vmatpush.bf16.msra.mxu0 %v437
    %513 = vmatpush.bf16.msra.mxu0 %v435
    %514 = vmatpush.bf16.msra.mxu0 %v433
    %515 = vmatpush.bf16.msra.mxu0 %v431
    %516 = vmatpush.bf16.msra.mxu0 %v429
    %517 = vmatpush.bf16.msra.mxu0 %v427
    %518 = vmatpush.bf16.msra.mxu0 %v425
    %519 = vmatpush.bf16.msra.mxu0 %v423
    %520 = vmatmul.bf16.gmra.mxu0 %v307
    %v521 = vpop.f32.mrf.mxu0
    %v522 = vadd.f32 %v508, %v521
    %v523 = vpop.f32.mrf.mxu0
    %v524 = vadd.f32 %v510, %v523
    %525 = vdwg.mxu0
    %v526 = vadd.f32 %v494, %v276
    %v527 = vadd.f32 %v522, %v290
    %v528 = vadd.f32 %v496, %v278
    %v529 = vadd.f32 %v524, %v292
    %530 = vst [vmem:[#allocation6] sm:$0xff] %v526
    %531 = vst [vmem:[#allocation6 + $0x8] sm:$0xff] %v527
    %532 = vst [vmem:[#allocation6 + $0x10] sm:$0xff] %v528
    %533 = vst [vmem:[#allocation6 + $0x18] sm:$0xff] %v529
    // Predicated region
    $region30: #{tpu_custom_call.1} parent=1 // pred_check
      _
    $region31: #{tpu_custom_call.1} parent=1 // pred_check_branch
      %535 = sbr.rel (0) target = $region33
    $region32: #{tpu_custom_call.1} parent=1 // pred_region
      %537 = vsyncadd [#allocation5], 0
      %s538 = sshll.u32 [#allocation6], 4
      %s539 = int_to_ptr.vmem [resolvable:$true] %s538
      %s540 = sshll.u32 %s5, 4
      %s541 = int_to_ptr.hbm [resolvable:$true] %s540
      %546 = dma.vmem_to_hbm [thread:$0]  %s539, 512, %s541, [#allocation5], 256, 256, 16
    $region33: #{tpu_custom_call.1} parent=1 // pred_fallthru
      _
    // Predicated region
    $region34: #{tpu_custom_call.1} parent=1 // pred_check
      _
    $region35: #{tpu_custom_call.1} parent=1 // pred_check_branch
      %548 = sbr.rel (0) target = $region37
    $region36: #{tpu_custom_call.1} parent=1 // pred_region
      %550 = dma.done [#allocation5], 512
    $region37: #{tpu_custom_call.1} parent=1 // pred_fallthru
      _
    %551 = vsyncpa [#allocation4], 1
    %552 = vsyncpa [#allocation5], 1

</llo_original>
